<compile_context>
chip_gen: v7x
topology: tpu7x:2x2x1
jax: 0.10.0
libtpu: 0.0.40
codegen_flags: <defaults>
</compile_context>

<pallas_src>
import math

import jax
import jax.numpy as jnp
from jax.experimental import pallas as pl
from jax.experimental.pallas import tpu as pltpu


def _round_up(x, m):
    return ((x + m - 1) // m) * m


def _cdiv(a, b):
    return -(-a // b)


def _pad_to(x, shape):
    pads = [(0, t - s) for s, t in zip(x.shape, shape)]
    if all(p == (0, 0) for p in pads):
        return x
    return jnp.pad(x, pads)


def _vmem_capacity_bytes():
    try:
        cap = int(pltpu.get_tpu_info().vmem_capacity_bytes)
        if cap > 0:
            return cap
    except Exception:
        pass
    return 64 * 1024 * 1024  # conservative fallback: v7x per-TensorCore VMEM


def _per_batch_vmem_bytes(npad, fpads, itemsize_cd, itemsize_out, use_mxu_bmm):
    """VMEM bytes per batch element of the grid block (pipeline + in-kernel)."""
    adj_lane = _round_up(npad, 128)            # adj is lane-padded to 128 in VMEM
    fin, fout = fpads[0], fpads[-1]
    max_f = max(fpads)
    # Double-buffered pipeline blocks (h in, adj in, out).
    blocks = 2 * npad * (adj_lane * itemsize_cd
                         + fin * itemsize_cd
                         + fout * itemsize_out)
    # In-kernel live values at the widest layer: adj value + h value (compute
    # dtype), f32 support + f32 out, and the cd-cast support on the MXU path.
    temps = npad * (adj_lane * itemsize_cd + max_f * itemsize_cd + 2 * max_f * 4)
    if use_mxu_bmm:
        temps += npad * max_f * itemsize_cd
    return blocks + temps


def _fixed_vmem_bytes(fpads, itemsize_cd):
    """tb-independent VMEM: weights/biases (double-buffered) + Mosaic scratch."""
    wb = 0
    for fin, fout in zip(fpads[:-1], fpads[1:]):
        wb += fin * fout * itemsize_cd            # padded weight
        wb += 8 * fout * 4                        # (1, fout) f32 bias -> 8 sublanes
    return 2 * wb + (2 << 20)


def _make_fused_gcn_kernel(num_layers, apply_relu, use_mxu_bmm):
    def kernel(*refs):
        h_ref, adj_ref = refs[0], refs[1]
        w_refs = refs[2:2 + num_layers]
        b_refs = refs[2 + num_layers:2 + 2 * num_layers]
        out_ref = refs[2 + 2 * num_layers]

        tb, npad, _ = h_ref.shape
        cd = h_ref.dtype

        # Static unroll over layers: GCN stacks are shallow (2-3 layers) and
        # each layer has its own padded weight shape, so a fori_loop cannot be
        # used; adj is re-read from VMEM at its point of use each layer to
        # keep live ranges short.
        h = h_ref[...]
        out = None
        for l in range(num_layers):
            fin, fout = w_refs[l].shape
            # support = h @ W : (tb*N, F_in) @ (F_in, F_out) on the MXU, f32 acc.
            support = jnp.dot(
                h.reshape(tb * npad, fin),
                w_refs[l][...],
                preferred_element_type=jnp.float32,
            ).reshape(tb, npad, fout)

            if use_mxu_bmm:
                # out = bmm(adj, support): lane-dense K (>=128) -> MXU.
                out = jnp.einsum(
                    "bnk,bkf->bnf",
                    adj_ref[...],
                    support.astype(cd),
                    preferred_element_type=jnp.float32,
                )
            else:
                # Tiny node count: VPU broadcast-MAC over k avoids lane-sparse
                # K=npad MXU pushes and the inter-matmul cast to compute dtype.
                adj = adj_ref[...].astype(jnp.float32)
                out = jnp.zeros((tb, npad, fout), jnp.float32)
                for k in range(npad):
                    out = out + adj[:, :, k:k + 1] * support[:, k:k + 1, :]

            out = out + b_refs[l][...][None].astype(jnp.float32)  # f32 epilogue
            if apply_relu:
                out = jnp.maximum(out, 0.0)
            h = out.astype(cd)

        out_ref[...] = out.astype(out_ref.dtype)

    return kernel


def prepare_adj(adj, *, compute_dtype=None):
    """Pad/cast the (per-graph constant) adjacency once, outside the hot path.

    Passing the returned tensor to graph_convolution(_network) makes the
    wrapper-side pad/cast a no-op, saving one full HBM round trip of the
    dominant tensor per call."""
    b, na, _ = adj.shape
    npad = _round_up(na, 8)
    cd = jnp.dtype(compute_dtype) if compute_dtype is not None else adj.dtype
    return _pad_to(adj.astype(cd), (b, npad, npad))


def _fused_gcn_call(h, adj, params, *, apply_relu, compute_dtype=None,
                    out_dtype=None):
    assert len(params) >= 1
    B, N, f_in = h.shape
    assert adj.ndim == 3 and adj.shape[0] == B and adj.shape[1] == adj.shape[2]
    assert adj.shape[1] >= N, (adj.shape, N)
    num_layers = len(params)

    dims = [f_in]
    for (w, _) in params:
        assert w.shape[0] == dims[-1], (w.shape, dims)
        dims.append(w.shape[1])
    f_out = dims[-1]

    cd = jnp.dtype(compute_dtype) if compute_dtype is not None else jnp.dtype(h.dtype)
    od = jnp.dtype(out_dtype) if out_dtype is not None else jnp.dtype(h.dtype)

    # Per-layer feature padding to a multiple of 128 (lane width); nodes padded
    # to a multiple of 8 (sublanes). Zero padding is mathematically inert and
    # sliced off at the end.
    fpads = [_round_up(d, 128) for d in dims]
    npad = _round_up(max(N, adj.shape[1]), 8)
    use_mxu_bmm = npad > 32

    itemsize_cd = cd.itemsize
    itemsize_out = od.itemsize
    per_b = _per_batch_vmem_bytes(npad, fpads, itemsize_cd, itemsize_out, use_mxu_bmm)
    fixed = _fixed_vmem_bytes(fpads, itemsize_cd)

    capacity = _vmem_capacity_bytes()
    target = (capacity * 3) // 4   # ~96 MiB on 128 MiB parts, ~48 MiB on v7x

    # Batch tile: largest that fits the scoped-VMEM target, capped at ceil(B/2)
    # when B > 1 so the "parallel" batch axis has >= 2 steps for megacore.
    cap_tb = 1 if B == 1 else _cdiv(B, 2)
    tb = max(1, min(cap_tb, (target - fixed) // max(per_b, 1)))
    grid_len = _cdiv(B, tb)
    b_pad = grid_len * tb          # pad the batch instead of divisor-searching

    needed = fixed + tb * per_b + (2 << 20)
    vmem_limit = int(max(min(max(needed, target), capacity - (4 << 20)), 32 << 20))

    # Pad + cast inputs (no-ops if the caller pre-prepared them, e.g. via
    # prepare_adj, and B is already a multiple of tb).
    h_p = _pad_to(h.astype(cd), (b_pad, npad, fpads[0]))
    adj_p = _pad_to(adj.astype(cd), (b_pad, npad, npad))

    w_list, b_list = [], []
    for l, (w, b) in enumerate(params):
        w_list.append(_pad_to(w.astype(cd), (fpads[l], fpads[l + 1])))
        if b is None:
            b_arr = jnp.zeros((1, fpads[l + 1]), jnp.float32)
        else:
            b_arr = _pad_to(b.reshape(1, -1).astype(jnp.float32),
                            (1, fpads[l + 1]))
        b_list.append(b_arr)

    kernel = _make_fused_gcn_kernel(num_layers, apply_relu, use_mxu_bmm)

    in_specs = (
        [pl.BlockSpec((tb, npad, fpads[0]), lambda i: (i, 0, 0)),
         pl.BlockSpec((tb, npad, npad), lambda i: (i, 0, 0))]
        + [pl.BlockSpec((fpads[l], fpads[l + 1]), lambda i: (0, 0))
           for l in range(num_layers)]
        + [pl.BlockSpec((1, fpads[l + 1]), lambda i: (0, 0))
           for l in range(num_layers)]
    )

    out_padded = pl.pallas_call(
        kernel,
        out_shape=jax.ShapeDtypeStruct((b_pad, npad, fpads[-1]), od),
        grid_spec=pltpu.PrefetchScalarGridSpec(
            num_scalar_prefetch=0,
            grid=(grid_len,),
            in_specs=in_specs,
            out_specs=pl.BlockSpec((tb, npad, fpads[-1]), lambda i: (i, 0, 0)),
        ),
        compiler_params=pltpu.CompilerParams(
            dimension_semantics=("parallel",),
            vmem_limit_bytes=vmem_limit,
        ),
    )(h_p, adj_p, *w_list, *b_list)

    # Slice off the (inert) node / feature / batch padding.
    return out_padded[:B, :N, :f_out]


def graph_convolution(h, adj, w, b, *, compute_dtype=None, out_dtype=None):
    """Exact GraphConvolution.forward: bmm(adj, h @ w) (+ b if b is not None)."""
    return _fused_gcn_call(h, adj, [(w, b)], apply_relu=False,
                           compute_dtype=compute_dtype, out_dtype=out_dtype)


def graph_convolution_network(h, adj, params, *, compute_dtype=None,
                              out_dtype=None):
    """Stack of GraphConvolution layers with ReLU after each one (the
    GraphConvolutionNetwork wrapper in eval mode: mask=None, gc_ln=False,
    dropout=0.0), fused into one pallas_call so adj/h stay in VMEM across
    layers."""
    # TODO(synk): gc_ln LayerNormalization and training-mode dropout are
    # identity under the reference defaults and are not implemented.
    return _fused_gcn_call(h, adj, params, apply_relu=True,
                           compute_dtype=compute_dtype, out_dtype=out_dtype)


def init_gcn_params(key, input_dim, layers_dim):
    """Matches GraphConvolution.reset_parameters: uniform(-stdv, stdv),
    stdv = 1/sqrt(out_features)."""
    params = []
    features_dim = input_dim
    for hidden_dim in layers_dim:
        key, kw, kb = jax.random.split(key, 3)
        stdv = 1.0 / math.sqrt(hidden_dim)
        w = jax.random.uniform(kw, (features_dim, hidden_dim), jnp.float32,
                               -stdv, stdv)
        b = jax.random.uniform(kb, (hidden_dim,), jnp.float32, -stdv, stdv)
        params.append((w, b))
        features_dim = hidden_dim
    return params


def _reference_gcn_layer(h, adj, w, b):
    support = jnp.matmul(h, w)
    out = jnp.matmul(adj, support)
    return out if b is None else out + b


def _reference_network(h, adj, params):
    for w, b in params:
        h = jax.nn.relu(_reference_gcn_layer(h, adj, w, b))
    return h


if __name__ == "__main__":
    key = jax.random.PRNGKey(0)

    # Shapes consistent with the module's forward:
    #   h: (batch, node_num, feature_dim), adj: (batch, node_num, node_num)
    B, N, input_dim = 2, 8, 16
    hidden_dim, output_dim = 32, 16

    key, kh, ka = jax.random.split(key, 3)
    h = jax.random.normal(kh, (B, N, input_dim), jnp.float32)
    adj = jax.random.uniform(ka, (B, N, N), jnp.float32)

    # --- single GraphConvolution layer (exact spec semantics: no ReLU) ---
    (w0, b0), = init_gcn_params(key, input_dim, [hidden_dim])
    out1 = graph_convolution(h, adj, w0, b0)
    jax.block_until_ready(out1)
    ref1 = _reference_gcn_layer(h, adj, w0, b0)
    assert out1.shape == (B, N, hidden_dim), out1.shape
    assert jnp.allclose(out1, ref1, rtol=3e-2, atol=3e-2)

    # --- bias=None variant of the module ---
    out1n = graph_convolution(h, adj, w0, None)
    jax.block_until_ready(out1n)
    ref1n = _reference_gcn_layer(h, adj, w0, None)
    assert jnp.allclose(out1n, ref1n, rtol=3e-2, atol=3e-2)

    # --- fused two-layer GCN network (ReLU between layers), one pallas_call ---
    params = init_gcn_params(key, input_dim, [hidden_dim, output_dim])
    out2 = graph_convolution_network(h, adj, params)
    jax.block_until_ready(out2)
    ref2 = _reference_network(h, adj, params)
    assert out2.shape == (B, N, output_dim), out2.shape
    assert jnp.allclose(out2, ref2, rtol=3e-2, atol=3e-2)

    # --- pre-padded adjacency (caller hoists the per-graph-constant pad) ---
    out2b = graph_convolution_network(h, prepare_adj(adj), params)
    jax.block_until_ready(out2b)
    assert jnp.allclose(out2b, ref2, rtol=3e-2, atol=3e-2)

    # --- bf16 storage path (v5e/v6e/v7x) with bf16 writeback ---
    out3 = graph_convolution_network(h, adj, params,
                                     compute_dtype=jnp.bfloat16,
                                     out_dtype=jnp.bfloat16)
    jax.block_until_ready(out3)
    assert out3.shape == (B, N, output_dim), out3.shape
    assert out3.dtype == jnp.bfloat16
    assert jnp.allclose(out3.astype(jnp.float32), ref2, rtol=1e-1, atol=1e-1)

    print("KERNEL_OK")
</pallas_src>

<mosaic_0001>
module attributes {stable_mosaic.version = 11 : i64} {
  func.func @kernel(%arg0: i32, %arg1: memref<1x8x128xf32, #tpu.memory_space<vmem>>, %arg2: memref<1x8x8xf32, #tpu.memory_space<vmem>>, %arg3: memref<128x128xf32, #tpu.memory_space<vmem>>, %arg4: memref<1x128xf32, #tpu.memory_space<vmem>>, %arg5: memref<1x8x128xf32, #tpu.memory_space<vmem>>) attributes {dimension_semantics = [#tpu.dimension_semantics<parallel>], iteration_bounds = array<i64: 2>, scalar_prefetch = 0 : i64, scratch_operands = 0 : i64, tpu.core_type = #tpu.core_type<tc>, window_params = [{transform_indices = @transform_0, window_bounds = array<i64: 1, 8, 128>}, {transform_indices = @transform_1, window_bounds = array<i64: 1, 8, 8>}, {pipeline_mode = #tpu.pipeline_mode<synchronous>, transform_indices = @transform_2, window_bounds = array<i64: 128, 128>}, {pipeline_mode = #tpu.pipeline_mode<synchronous>, transform_indices = @transform_3, window_bounds = array<i64: 1, 128>}, {transform_indices = @transform_4, window_bounds = array<i64: 1, 8, 128>}]} {
    %c0 = arith.constant 0 : index
    %c0_0 = arith.constant 0 : index
    %c0_1 = arith.constant 0 : index
    %0 = vector.load %arg1[%c0, %c0_0, %c0_1] : memref<1x8x128xf32, #tpu.memory_space<vmem>>, vector<1x8x128xf32>
    %1 = vector.shape_cast %0 : vector<1x8x128xf32> to vector<8x128xf32>
    %c0_2 = arith.constant 0 : index
    %c0_3 = arith.constant 0 : index
    %2 = vector.load %arg3[%c0_2, %c0_3] : memref<128x128xf32, #tpu.memory_space<vmem>>, vector<128x128xf32>
    %cst = arith.constant dense<0.000000e+00> : vector<8x128xf32>
    %3 = tpu.matmul %1, %2, %cst {dimension_numbers = #tpu.dot_dimension_numbers<[1], [0], [0], [1], [0, 0, 1, 1], [], []>} : vector<8x128xf32>, vector<128x128xf32>, vector<8x128xf32> -> vector<8x128xf32>
    %4 = vector.shape_cast %3 : vector<8x128xf32> to vector<1x8x128xf32>
    %c0_4 = arith.constant 0 : index
    %c0_5 = arith.constant 0 : index
    %c0_6 = arith.constant 0 : index
    %5 = vector.load %arg2[%c0_4, %c0_5, %c0_6] : memref<1x8x8xf32, #tpu.memory_space<vmem>>, vector<1x8x8xf32>
    %cst_7 = arith.constant 0.000000e+00 : f32
    %6 = vector.broadcast %cst_7 : f32 to vector<1x8x128xf32>
    %7 = vector.extract_strided_slice %5 {offsets = [0, 0, 0], sizes = [1, 8, 1], strides = [1, 1, 1]} : vector<1x8x8xf32> to vector<1x8x1xf32>
    %8 = vector.extract_strided_slice %4 {offsets = [0, 0, 0], sizes = [1, 1, 128], strides = [1, 1, 1]} : vector<1x8x128xf32> to vector<1x1x128xf32>
    %9 = vector.broadcast %7 : vector<1x8x1xf32> to vector<1x8x128xf32>
    %10 = vector.broadcast %8 : vector<1x1x128xf32> to vector<1x8x128xf32>
    %11 = arith.mulf %9, %10 : vector<1x8x128xf32>
    %12 = arith.addf %6, %11 : vector<1x8x128xf32>
    %13 = vector.extract_strided_slice %5 {offsets = [0, 0, 1], sizes = [1, 8, 1], strides = [1, 1, 1]} : vector<1x8x8xf32> to vector<1x8x1xf32>
    %14 = vector.extract_strided_slice %4 {offsets = [0, 1, 0], sizes = [1, 1, 128], strides = [1, 1, 1]} : vector<1x8x128xf32> to vector<1x1x128xf32>
    %15 = vector.broadcast %13 : vector<1x8x1xf32> to vector<1x8x128xf32>
    %16 = vector.broadcast %14 : vector<1x1x128xf32> to vector<1x8x128xf32>
    %17 = arith.mulf %15, %16 : vector<1x8x128xf32>
    %18 = arith.addf %12, %17 : vector<1x8x128xf32>
    %19 = vector.extract_strided_slice %5 {offsets = [0, 0, 2], sizes = [1, 8, 1], strides = [1, 1, 1]} : vector<1x8x8xf32> to vector<1x8x1xf32>
    %20 = vector.extract_strided_slice %4 {offsets = [0, 2, 0], sizes = [1, 1, 128], strides = [1, 1, 1]} : vector<1x8x128xf32> to vector<1x1x128xf32>
    %21 = vector.broadcast %19 : vector<1x8x1xf32> to vector<1x8x128xf32>
    %22 = vector.broadcast %20 : vector<1x1x128xf32> to vector<1x8x128xf32>
    %23 = arith.mulf %21, %22 : vector<1x8x128xf32>
    %24 = arith.addf %18, %23 : vector<1x8x128xf32>
    %25 = vector.extract_strided_slice %5 {offsets = [0, 0, 3], sizes = [1, 8, 1], strides = [1, 1, 1]} : vector<1x8x8xf32> to vector<1x8x1xf32>
    %26 = vector.extract_strided_slice %4 {offsets = [0, 3, 0], sizes = [1, 1, 128], strides = [1, 1, 1]} : vector<1x8x128xf32> to vector<1x1x128xf32>
    %27 = vector.broadcast %25 : vector<1x8x1xf32> to vector<1x8x128xf32>
    %28 = vector.broadcast %26 : vector<1x1x128xf32> to vector<1x8x128xf32>
    %29 = arith.mulf %27, %28 : vector<1x8x128xf32>
    %30 = arith.addf %24, %29 : vector<1x8x128xf32>
    %31 = vector.extract_strided_slice %5 {offsets = [0, 0, 4], sizes = [1, 8, 1], strides = [1, 1, 1]} : vector<1x8x8xf32> to vector<1x8x1xf32>
    %32 = vector.extract_strided_slice %4 {offsets = [0, 4, 0], sizes = [1, 1, 128], strides = [1, 1, 1]} : vector<1x8x128xf32> to vector<1x1x128xf32>
    %33 = vector.broadcast %31 : vector<1x8x1xf32> to vector<1x8x128xf32>
    %34 = vector.broadcast %32 : vector<1x1x128xf32> to vector<1x8x128xf32>
    %35 = arith.mulf %33, %34 : vector<1x8x128xf32>
    %36 = arith.addf %30, %35 : vector<1x8x128xf32>
    %37 = vector.extract_strided_slice %5 {offsets = [0, 0, 5], sizes = [1, 8, 1], strides = [1, 1, 1]} : vector<1x8x8xf32> to vector<1x8x1xf32>
    %38 = vector.extract_strided_slice %4 {offsets = [0, 5, 0], sizes = [1, 1, 128], strides = [1, 1, 1]} : vector<1x8x128xf32> to vector<1x1x128xf32>
    %39 = vector.broadcast %37 : vector<1x8x1xf32> to vector<1x8x128xf32>
    %40 = vector.broadcast %38 : vector<1x1x128xf32> to vector<1x8x128xf32>
    %41 = arith.mulf %39, %40 : vector<1x8x128xf32>
    %42 = arith.addf %36, %41 : vector<1x8x128xf32>
    %43 = vector.extract_strided_slice %5 {offsets = [0, 0, 6], sizes = [1, 8, 1], strides = [1, 1, 1]} : vector<1x8x8xf32> to vector<1x8x1xf32>
    %44 = vector.extract_strided_slice %4 {offsets = [0, 6, 0], sizes = [1, 1, 128], strides = [1, 1, 1]} : vector<1x8x128xf32> to vector<1x1x128xf32>
    %45 = vector.broadcast %43 : vector<1x8x1xf32> to vector<1x8x128xf32>
    %46 = vector.broadcast %44 : vector<1x1x128xf32> to vector<1x8x128xf32>
    %47 = arith.mulf %45, %46 : vector<1x8x128xf32>
    %48 = arith.addf %42, %47 : vector<1x8x128xf32>
    %49 = vector.extract_strided_slice %5 {offsets = [0, 0, 7], sizes = [1, 8, 1], strides = [1, 1, 1]} : vector<1x8x8xf32> to vector<1x8x1xf32>
    %50 = vector.extract_strided_slice %4 {offsets = [0, 7, 0], sizes = [1, 1, 128], strides = [1, 1, 1]} : vector<1x8x128xf32> to vector<1x1x128xf32>
    %51 = vector.broadcast %49 : vector<1x8x1xf32> to vector<1x8x128xf32>
    %52 = vector.broadcast %50 : vector<1x1x128xf32> to vector<1x8x128xf32>
    %53 = arith.mulf %51, %52 : vector<1x8x128xf32>
    %54 = arith.addf %48, %53 : vector<1x8x128xf32>
    %c0_8 = arith.constant 0 : index
    %c0_9 = arith.constant 0 : index
    %55 = vector.load %arg4[%c0_8, %c0_9] : memref<1x128xf32, #tpu.memory_space<vmem>>, vector<1x128xf32>
    %56 = vector.shape_cast %55 : vector<1x128xf32> to vector<1x1x128xf32>
    %57 = vector.broadcast %56 : vector<1x1x128xf32> to vector<1x8x128xf32>
    %58 = arith.addf %54, %57 : vector<1x8x128xf32>
    %c0_10 = arith.constant 0 : index
    %c0_11 = arith.constant 0 : index
    %c0_12 = arith.constant 0 : index
    %59 = vector.load %arg5[%c0_10, %c0_11, %c0_12] : memref<1x8x128xf32, #tpu.memory_space<vmem>>, vector<1x8x128xf32>
    tpu.vector_store %arg5[%c0_10, %c0_11, %c0_12], %58 {strides = array<i32>} : memref<1x8x128xf32, #tpu.memory_space<vmem>>, vector<1x8x128xf32>,
    return
  }
  func.func @transform_0(%arg0: i32) -> (i32, i32, i32) {
    %c0_i32 = arith.constant 0 : i32
    %c0_i32_0 = arith.constant 0 : i32
    %c0_i32_1 = arith.constant 0 : i32
    return %arg0, %c0_i32, %c0_i32_0 : i32, i32, i32
  }
  func.func @transform_1(%arg0: i32) -> (i32, i32, i32) {
    %c0_i32 = arith.constant 0 : i32
    %c0_i32_0 = arith.constant 0 : i32
    %c0_i32_1 = arith.constant 0 : i32
    return %arg0, %c0_i32, %c0_i32_0 : i32, i32, i32
  }
  func.func @transform_2(%arg0: i32) -> (i32, i32) {
    %c0_i32 = arith.constant 0 : i32
    %c0_i32_0 = arith.constant 0 : i32
    %c0_i32_1 = arith.constant 0 : i32
    return %c0_i32, %c0_i32_0 : i32, i32
  }
  func.func @transform_3(%arg0: i32) -> (i32, i32) {
    %c0_i32 = arith.constant 0 : i32
    %c0_i32_0 = arith.constant 0 : i32
    %c0_i32_1 = arith.constant 0 : i32
    return %c0_i32, %c0_i32_0 : i32, i32
  }
  func.func @transform_4(%arg0: i32) -> (i32, i32, i32) {
    %c0_i32 = arith.constant 0 : i32
    %c0_i32_0 = arith.constant 0 : i32
    %c0_i32_1 = arith.constant 0 : i32
    return %arg0, %c0_i32, %c0_i32_0 : i32, i32, i32
  }
}

</mosaic_0001>

<llo_original>
// kernel: tpu_custom_call.1
$region0: #{tpu_custom_call.1}
  #allocation0 [shape = 'u32[]', space=smem, size = 0x4, offset = 0x4, fixed_abs, tag = 'smem constant byte address 0x4 - core index']
  #allocation1 [shape = 'u32[144,128]{1,0:T(1,128)}', space=vmem, size = 0x12000, scoped, tag = 'internal scratch']
  %s0 = inlined_call_operand.hbm [shape: f32[2,8,128], index: 0, kind: input, shape index: {}]
  %s1 = inlined_call_operand.hbm [shape: f32[2,8,8], index: 1, kind: input, shape index: {}]
  %s2 = inlined_call_operand.hbm [shape: f32[128,128], index: 2, kind: input, shape index: {}]
  %s3 = inlined_call_operand.vmem [shape: f32[1,128], index: 3, kind: input, shape index: {}]
  %s4 = inlined_call_operand.hbm [shape: f32[2,8,128], index: 4, kind: output, shape index: {}]
  %s5 = sld [smem:[#allocation0]]
  $region61: #{tpu_custom_call.1} parent=0
    _
  %s7 = ssub.s32 1, %s5
  %s8 = scalar_select 0, %s7, %s5
  $region1: #{tpu_custom_call.1} parent=0
    #allocation2 [shape = 'u8[8192]{0}', space=vmem, size = 0x2000, scoped, tag = 'input window, operand 0']
    #allocation3 [shape = 's32[2]{0}', space=sflag, size = 0x8, scoped, tag = 'scoped memory for tpu_custom_call.1']
    #allocation4 [shape = 's32[2]{0}', space=sflag, size = 0x8, scoped, tag = 'scoped memory for tpu_custom_call.1']
    #allocation5 [shape = 'u8[8192]{0}', space=vmem, size = 0x2000, scoped, tag = 'input window, operand 1']
    #allocation6 [shape = 's32[2]{0}', space=sflag, size = 0x8, scoped, tag = 'scoped memory for tpu_custom_call.1']
    #allocation7 [shape = 'u8[65536]{0}', space=vmem, size = 0x10000, scoped, tag = 'input window, operand 2, single buffered']
    #allocation8 [shape = 'u8[8192]{0}', space=vmem, size = 0x2000, scoped, tag = 'output window, operand 0']
    %9 = vsyncpa [#allocation3], 0
    %s10 = scalar_lea.sflag [#allocation3], 1
    %11 = vsyncpa %s10, 0
    %12 = vsyncpa [#allocation6], 0
    %s13 = scalar_lea.sflag [#allocation6], 1
    %14 = vsyncpa %s13, 0
    %15 = vsyncpa [#allocation4], 0
    %s16 = scalar_lea.sflag [#allocation4], 1
    %17 = vsyncpa %s16, 0
    loop: start=0, step=1, limit=4
    $region2: #{tpu_custom_call.1} parent=1 // loop_pre_header
      _
    $region3: #{tpu_custom_call.1} parent=1 // loop_header
      %s19 = sphi 0, %s23
      %p20 = scmp.ge.s32.totalorder %s19, 4
      %s29 = sphi 0, %s31
      %s32 = sphi 0, %s29
      %s33 = sphi 0, %s32
      %s49 = sphi 0, %s33
      %s55 = sphi 0, %s57
      %s58 = sphi 0, %s55
      %s59 = sphi 0, %s58
      %s75 = sphi 0, %s59
      %s79 = sphi 0, %s79
      %s81 = sphi 0, %s79
      %s82 = sphi 0, %s81
      %s96 = sphi 0, %s82
      %s100 = sphi 0, %s100
      %s102 = sphi 0, %s100
      %s103 = sphi 0, %s102
      %s117 = sphi 0, %s103
      %s123 = sphi 0, %s125
      %s126 = sphi 0, %s123
      %s127 = sphi 0, %s126
      %s143 = sphi 0, %s127
    $region4: #{tpu_custom_call.1} parent=1 // loop_header_branch
      %22 = sbr.rel (%p20) target = $region8
    $region5: #{tpu_custom_call.1} parent=1 // loop_body
      %s24 = ssub.s32 %s19, 1
      %s25 = ssub.s32 %s19, 2
      %s26 = sadd.s32 %s19, 1
      %s27 = ssub.s32 %s19, %s26
      %p28 = scmp.eq.s32.totalorder %s27, 0
      %s30 = sadd.s32 %s29, 1
      %s31 = scalar_select %p28, %s29, %s30
      %p34 = pneg %p28
      %p35 = scmp.eq.s32.totalorder %s19, 1
      %p36 = por %p34, %p35
      %p37 = scmp.ne.s32.totalorder %s29, %s32
      %p38 = scmp.eq.s32.totalorder %s19, 0
      %p39 = por %p37, %p38
      %p40 = scmp.ne.s32.totalorder %s29, %s32
      %p41 = scmp.eq.s32.totalorder %s24, 1
      %p42 = por %p40, %p41
      %p43 = scmp.ne.s32.totalorder %s32, %s33
      %p44 = scmp.eq.s32.totalorder %s24, 0
      %p45 = por %p43, %p44
      %p46 = scmp.ne.s32.totalorder %s32, %s33
      %p47 = scmp.eq.s32.totalorder %s25, 1
      %p48 = por %p46, %p47
      %p50 = scmp.ne.s32.totalorder %s33, %s49
      %p51 = scmp.eq.s32.totalorder %s25, 0
      %p52 = por %p50, %p51
      %s53 = ssub.s32 %s19, %s26
      %p54 = scmp.eq.s32.totalorder %s53, 0
      %s56 = sadd.s32 %s55, 1
      %s57 = scalar_select %p54, %s55, %s56
      %p60 = pneg %p54
      %p61 = scmp.eq.s32.totalorder %s19, 1
      %p62 = por %p60, %p61
      %p63 = scmp.ne.s32.totalorder %s55, %s58
      %p64 = scmp.eq.s32.totalorder %s19, 0
      %p65 = por %p63, %p64
      %p66 = scmp.ne.s32.totalorder %s55, %s58
      %p67 = scmp.eq.s32.totalorder %s24, 1
      %p68 = por %p66, %p67
      %p69 = scmp.ne.s32.totalorder %s58, %s59
      %p70 = scmp.eq.s32.totalorder %s24, 0
      %p71 = por %p69, %p70
      %p72 = scmp.ne.s32.totalorder %s58, %s59
      %p73 = scmp.eq.s32.totalorder %s25, 1
      %p74 = por %p72, %p73
      %p76 = scmp.ne.s32.totalorder %s59, %s75
      %p77 = scmp.eq.s32.totalorder %s25, 0
      %p78 = por %p76, %p77
      %s80 = sadd.s32 %s79, 1
      %p83 = scmp.eq.s32.totalorder %s19, 1
      %p84 = scmp.ne.s32.totalorder %s79, %s81
      %p85 = scmp.eq.s32.totalorder %s19, 0
      %p86 = por %p84, %p85
      %p87 = scmp.ne.s32.totalorder %s79, %s81
      %p88 = scmp.eq.s32.totalorder %s24, 1
      %p89 = por %p87, %p88
      %p90 = scmp.ne.s32.totalorder %s81, %s82
      %p91 = scmp.eq.s32.totalorder %s24, 0
      %p92 = por %p90, %p91
      %p93 = scmp.ne.s32.totalorder %s81, %s82
      %p94 = scmp.eq.s32.totalorder %s25, 1
      %p95 = por %p93, %p94
      %p97 = scmp.ne.s32.totalorder %s82, %s96
      %p98 = scmp.eq.s32.totalorder %s25, 0
      %p99 = por %p97, %p98
      %s101 = sadd.s32 %s100, 1
      %p104 = scmp.eq.s32.totalorder %s19, 1
      %p105 = scmp.ne.s32.totalorder %s100, %s102
      %p106 = scmp.eq.s32.totalorder %s19, 0
      %p107 = por %p105, %p106
      %p108 = scmp.ne.s32.totalorder %s100, %s102
      %p109 = scmp.eq.s32.totalorder %s24, 1
      %p110 = por %p108, %p109
      %p111 = scmp.ne.s32.totalorder %s102, %s103
      %p112 = scmp.eq.s32.totalorder %s24, 0
      %p113 = por %p111, %p112
      %p114 = scmp.ne.s32.totalorder %s102, %s103
      %p115 = scmp.eq.s32.totalorder %s25, 1
      %p116 = por %p114, %p115
      %p118 = scmp.ne.s32.totalorder %s103, %s117
      %p119 = scmp.eq.s32.totalorder %s25, 0
      %p120 = por %p118, %p119
      %s121 = ssub.s32 %s19, %s26
      %p122 = scmp.eq.s32.totalorder %s121, 0
      %s124 = sadd.s32 %s123, 1
      %s125 = scalar_select %p122, %s123, %s124
      %p128 = pneg %p122
      %p129 = scmp.eq.s32.totalorder %s19, 1
      %p130 = por %p128, %p129
      %p131 = scmp.ne.s32.totalorder %s123, %s126
      %p132 = scmp.eq.s32.totalorder %s19, 0
      %p133 = por %p131, %p132
      %p134 = scmp.ne.s32.totalorder %s123, %s126
      %p135 = scmp.eq.s32.totalorder %s24, 1
      %p136 = por %p134, %p135
      %p137 = scmp.ne.s32.totalorder %s126, %s127
      %p138 = scmp.eq.s32.totalorder %s24, 0
      %p139 = por %p137, %p138
      %p140 = scmp.ne.s32.totalorder %s126, %s127
      %p141 = scmp.eq.s32.totalorder %s25, 1
      %p142 = por %p140, %p141
      %p144 = scmp.ne.s32.totalorder %s127, %s143
      %p145 = scmp.eq.s32.totalorder %s25, 0
      %p146 = por %p144, %p145
      %p147 = scmp.le.s32.totalorder 1, %s19
      %p148 = scmp.lt.s32.totalorder %s19, 3
      %p149 = pnand %p147, %p148
      %p150 = pneg %p149
      // Predicated region
      $region9: #{tpu_custom_call.1} parent=5 // pred_check
        _
      $region10: #{tpu_custom_call.1} parent=5 // pred_check_branch
        %152 = sbr.rel (%p149) target = $region12
      $region11: #{tpu_custom_call.1} parent=5 // pred_region
        %s153 = ssub.s32 %s19, 1
        // Predicated region
        $region13: #{tpu_custom_call.1} parent=11 // pred_check
          %p154 = pneg %p92
        $region14: #{tpu_custom_call.1} parent=11 // pred_check_branch
          %156 = sbr.rel (%p154) target = $region16
        $region15: #{tpu_custom_call.1} parent=11 // pred_region
          %s158 = ssub.s32 2048, 2048
          %159 = vsyncadd [#allocation6], %s158
          %s160 = sshll.u32 [#allocation7], 4
          %s161 = int_to_ptr.vmem [resolvable:$true] %s160
          %166 = dma.hbm_to_vmem [thread:$0]  %s2, 2048, %s161, [#allocation6], 128, 128, 8
        $region16: #{tpu_custom_call.1} parent=11 // pred_fallthru
          _
        // Predicated region
        $region17: #{tpu_custom_call.1} parent=11 // pred_check
          %p167 = pneg %p113
        $region18: #{tpu_custom_call.1} parent=11 // pred_check_branch
          %169 = sbr.rel (%p167) target = $region20
        $region19: #{tpu_custom_call.1} parent=11 // pred_region
          _
        $region20: #{tpu_custom_call.1} parent=11 // pred_fallthru
          _
      $region12: #{tpu_custom_call.1} parent=5 // pred_fallthru
        _
      %p170 = scmp.lt.s32.totalorder %s19, 2
      // Predicated region
      $region21: #{tpu_custom_call.1} parent=5 // pred_check
        %p171 = pneg %p170
      $region22: #{tpu_custom_call.1} parent=5 // pred_check_branch
        %173 = sbr.rel (%p171) target = $region24
      $region23: #{tpu_custom_call.1} parent=5 // pred_region
        // Predicated region
        $region25: #{tpu_custom_call.1} parent=23 // pred_check
          %p174 = pneg %p39
        $region26: #{tpu_custom_call.1} parent=23 // pred_check_branch
          %176 = sbr.rel (%p174) target = $region28
        $region27: #{tpu_custom_call.1} parent=23 // pred_region
          %s177 = sand.u32 %s29, 1
          %s178 = scalar_lea.sflag [#allocation3], %s177
          %s179 = sand.u32 %s29, 1
          %s180 = smul.addr %s179, 8
          %s181 = scalar_lea.vmem [#allocation2], %s180
          %s183 = ssub.s32 128, 128
          %184 = vsyncadd %s178, %s183
          %s185 = smul.addr %s19, 128
          %s186 = scalar_lea.hbm %s0, %s185
          %s188 = sshll.u32 %s181, 4
          %s189 = int_to_ptr.vmem [resolvable:$true] %s188
          %191 = dma.hbm_to_vmem [thread:$0]  %s186, 128, %s189, %s178
        $region28: #{tpu_custom_call.1} parent=23 // pred_fallthru
          _
        // Predicated region
        $region29: #{tpu_custom_call.1} parent=23 // pred_check
          %p192 = pneg %p65
        $region30: #{tpu_custom_call.1} parent=23 // pred_check_branch
          %194 = sbr.rel (%p192) target = $region32
        $region31: #{tpu_custom_call.1} parent=23 // pred_region
          %s195 = sand.u32 %s19, 1
          %s196 = scalar_lea.sflag [#allocation6], %s195
          %s197 = sand.u32 %s55, 1
          %s198 = smul.addr %s197, 8
          %s199 = scalar_lea.vmem [#allocation5], %s198
          %s201 = ssub.s32 128, 128
          %202 = vsyncadd %s196, %s201
          %s203 = smul.addr %s19, 128
          %s204 = scalar_lea.hbm %s1, %s203
          %s206 = sshll.u32 %s199, 4
          %s207 = int_to_ptr.vmem [resolvable:$true] %s206
          %209 = dma.hbm_to_vmem [thread:$0]  %s204, 128, %s207, %s196
        $region32: #{tpu_custom_call.1} parent=23 // pred_fallthru
          _
      $region24: #{tpu_custom_call.1} parent=5 // pred_fallthru
        _
      %p210 = scmp.le.s32.totalorder 1, %s19
      %p211 = scmp.lt.s32.totalorder %s19, 3
      %p212 = pnand %p210, %p211
      %p213 = pneg %p212
      // Predicated region
      $region33: #{tpu_custom_call.1} parent=5 // pred_check
        _
      $region34: #{tpu_custom_call.1} parent=5 // pred_check_branch
        %215 = sbr.rel (%p212) target = $region36
      $region35: #{tpu_custom_call.1} parent=5 // pred_region
        %s216 = ssub.s32 %s19, 1
        %s217 = sand.u32 %s32, 1
        %s218 = scalar_lea.sflag [#allocation3], %s217
        %s219 = sand.u32 %s32, 1
        %s220 = smul.addr %s219, 8
        %s221 = scalar_lea.vmem [#allocation2], %s220
        // Predicated region
        $region37: #{tpu_custom_call.1} parent=35 // pred_check
          %p222 = pneg %p45
        $region38: #{tpu_custom_call.1} parent=35 // pred_check_branch
          %224 = sbr.rel (%p222) target = $region40
        $region39: #{tpu_custom_call.1} parent=35 // pred_region
          %225 = dma.done %s218, 128
        $region40: #{tpu_custom_call.1} parent=35 // pred_fallthru
          _
        %s226 = sand.u32 %s24, 1
        %s227 = scalar_lea.sflag [#allocation6], %s226
        %s228 = sand.u32 %s58, 1
        %s229 = smul.addr %s228, 8
        %s230 = scalar_lea.vmem [#allocation5], %s229
        // Predicated region
        $region41: #{tpu_custom_call.1} parent=35 // pred_check
          %p231 = pneg %p71
        $region42: #{tpu_custom_call.1} parent=35 // pred_check_branch
          %233 = sbr.rel (%p231) target = $region44
        $region43: #{tpu_custom_call.1} parent=35 // pred_region
          %234 = dma.done %s227, 128
        $region44: #{tpu_custom_call.1} parent=35 // pred_fallthru
          _
        // Predicated region
        $region45: #{tpu_custom_call.1} parent=35 // pred_check
          %p235 = pneg %p92
        $region46: #{tpu_custom_call.1} parent=35 // pred_check_branch
          %237 = sbr.rel (%p235) target = $region48
        $region47: #{tpu_custom_call.1} parent=35 // pred_region
          %238 = dma.done [#allocation6], 2048
        $region48: #{tpu_custom_call.1} parent=35 // pred_fallthru
          _
        %s239 = sand.u32 %s32, 1
        %s240 = scalar_lea.sflag [#allocation3], %s239
        %s241 = sand.u32 %s32, 1
        %s242 = smul.addr %s241, 8
        %s243 = scalar_lea.vmem [#allocation2], %s242
        %p244 = pneg %p45
        %p245 = pneg %p42
        %s246 = sand.u32 %s24, 1
        %s247 = scalar_lea.sflag [#allocation6], %s246
        %s248 = sand.u32 %s58, 1
        %s249 = smul.addr %s248, 8
        %s250 = scalar_lea.vmem [#allocation5], %s249
        %p251 = pneg %p71
        %p252 = pneg %p68
        %p253 = pneg %p92
        %p254 = pneg %p89
        %p255 = pneg %p113
        %p256 = pneg %p110
        %p257 = pneg %p139
        %p258 = pneg %p136
        %s259 = sand.u32 %s126, 1
        %s260 = scalar_lea.sflag [#allocation4], %s259
        %s261 = sand.u32 %s126, 1
        %s262 = smul.addr %s261, 8
        %s263 = scalar_lea.vmem [#allocation8], %s262
        %v264 = vld [vmem:[%s221] sm:$0xff]
        %v265 = vld [vmem:[#allocation7] sm:$0xff]
        %v266 = vld [vmem:[#allocation7 + $0x8] sm:$0xff]
        %v267 = vld [vmem:[#allocation7 + $0x10] sm:$0xff]
        %v268 = vld [vmem:[#allocation7 + $0x18] sm:$0xff]
        %v269 = vld [vmem:[#allocation7 + $0x20] sm:$0xff]
        %v270 = vld [vmem:[#allocation7 + $0x28] sm:$0xff]
        %v271 = vld [vmem:[#allocation7 + $0x30] sm:$0xff]
        %v272 = vld [vmem:[#allocation7 + $0x38] sm:$0xff]
        %v273 = vld [vmem:[#allocation7 + $0x40] sm:$0xff]
        %v274 = vld [vmem:[#allocation7 + $0x48] sm:$0xff]
        %v275 = vld [vmem:[#allocation7 + $0x50] sm:$0xff]
        %v276 = vld [vmem:[#allocation7 + $0x58] sm:$0xff]
        %v277 = vld [vmem:[#allocation7 + $0x60] sm:$0xff]
        %v278 = vld [vmem:[#allocation7 + $0x68] sm:$0xff]
        %v279 = vld [vmem:[#allocation7 + $0x70] sm:$0xff]
        %v280 = vld [vmem:[#allocation7 + $0x78] sm:$0xff]
        %281 = vmatprep.subr.mxu0 0.0
        %282 = vmatpush1.msra.mxu0 %v265
        %283 = vmatprep.subr.mxu0 0.0
        %284 = vmatpush1.msra.mxu0 %v266
        %285 = vmatprep.subr.mxu0 0.0
        %286 = vmatpush1.msra.mxu0 %v267
        %287 = vmatprep.subr.mxu0 0.0
        %288 = vmatpush1.msra.mxu0 %v268
        %289 = vmatprep.subr.mxu0 0.0
        %290 = vmatpush1.msra.mxu0 %v269
        %291 = vmatprep.subr.mxu0 0.0
        %292 = vmatpush1.msra.mxu0 %v270
        %293 = vmatprep.subr.mxu0 0.0
        %294 = vmatpush1.msra.mxu0 %v271
        %295 = vmatprep.subr.mxu0 0.0
        %296 = vmatpush1.msra.mxu0 %v272
        %297 = vmatprep.subr.mxu0 0.0
        %298 = vmatpush1.msra.mxu0 %v273
        %299 = vmatprep.subr.mxu0 0.0
        %300 = vmatpush1.msra.mxu0 %v274
        %301 = vmatprep.subr.mxu0 0.0
        %302 = vmatpush1.msra.mxu0 %v275
        %303 = vmatprep.subr.mxu0 0.0
        %304 = vmatpush1.msra.mxu0 %v276
        %305 = vmatprep.subr.mxu0 0.0
        %306 = vmatpush1.msra.mxu0 %v277
        %307 = vmatprep.subr.mxu0 0.0
        %308 = vmatpush1.msra.mxu0 %v278
        %309 = vmatprep.subr.mxu0 0.0
        %310 = vmatpush1.msra.mxu0 %v279
        %311 = vmatprep.subr.mxu0 0.0
        %312 = vmatpush1.msra.mxu0 %v280
        %313 = vmatprep.subr.mxu0 0.0
        %314 = vmatpush1.msra.mxu0 0.0
        %315 = vmatprep.subr.mxu0 0.0
        %316 = vmatpush1.msra.mxu0 0.0
        %317 = vmatprep.subr.mxu0 0.0
        %318 = vmatpush1.msra.mxu0 0.0
        %319 = vmatprep.subr.mxu0 0.0
        %320 = vmatpush1.msra.mxu0 0.0
        %321 = vmatprep.subr.mxu0 0.0
        %322 = vmatpush1.msra.mxu0 0.0
        %323 = vmatprep.subr.mxu0 0.0
        %324 = vmatpush1.msra.mxu0 0.0
        %325 = vmatprep.subr.mxu0 0.0
        %326 = vmatpush1.msra.mxu0 0.0
        %327 = vmatprep.subr.mxu0 0.0
        %328 = vmatpush1.msra.mxu0 0.0
        %329 = vmatprep.subr.mxu0 0.0
        %330 = vmatpush1.msra.mxu0 0.0
        %331 = vmatprep.subr.mxu0 0.0
        %332 = vmatpush1.msra.mxu0 0.0
        %333 = vmatprep.subr.mxu0 0.0
        %334 = vmatpush1.msra.mxu0 0.0
        %335 = vmatprep.subr.mxu0 0.0
        %336 = vmatpush1.msra.mxu0 0.0
        %337 = vmatprep.subr.mxu0 0.0
        %338 = vmatpush1.msra.mxu0 0.0
        %339 = vmatprep.subr.mxu0 0.0
        %340 = vmatpush1.msra.mxu0 0.0
        %341 = vmatprep.subr.mxu0 0.0
        %342 = vmatpush1.msra.mxu0 0.0
        %343 = vmatprep.subr.mxu0 0.0
        %344 = vmatpush1.msra.mxu0 0.0
        %345 = vmatprep.mubr.f32.mxu0 0.0
        %346 = vmatmul.mubr.f32.gmra.mrb[0].mxu0 %v264
        %v347 = vpop.f32.mrb[0].mxu0
        %v348 = vadd.f32 0.0, %v347
        %v349 = vpop.f32.mrb[0].mxu0
        %350 = vdwg.mxu0
        %v351 = vld [vmem:[%s230] sm:$0xff]
        %353 = vset.pattern.permute.xlu0 0
        %354 = vperm.xlu0 %353, %v351
        %v355 = vpop.permute.xlu0 %354
        %v357 = vlaneseq
        %v358 = vshrl.u32 %v357, 7
        %v359 = vsub.s32 0, %v358
        %v360 = vrot.slane %v348, %v359
        %v361 = vmul.f32 %v355, %v360
        %v362 = vadd.f32 %v361, 0.0
        %363 = vset.pattern.permute.xlu0 1
        %364 = vperm.xlu0 %363, %v351
        %v365 = vpop.permute.xlu0 %364
        %v367 = vlaneseq
        %v368 = vshrl.u32 %v367, 7
        %v369 = vsub.s32 1, %v368
        %v370 = vrot.slane %v348, %v369
        %v371 = vmul.f32 %v365, %v370
        %v372 = vadd.f32 %v362, %v371
        %373 = vset.pattern.permute.xlu0 2
        %374 = vperm.xlu0 %373, %v351
        %v375 = vpop.permute.xlu0 %374
        %v377 = vlaneseq
        %v378 = vshrl.u32 %v377, 7
        %v379 = vsub.s32 2, %v378
        %v380 = vrot.slane %v348, %v379
        %v381 = vmul.f32 %v375, %v380
        %v382 = vadd.f32 %v372, %v381
        %383 = vset.pattern.permute.xlu0 3
        %384 = vperm.xlu0 %383, %v351
        %v385 = vpop.permute.xlu0 %384
        %v387 = vlaneseq
        %v388 = vshrl.u32 %v387, 7
        %v389 = vsub.s32 3, %v388
        %v390 = vrot.slane %v348, %v389
        %v391 = vmul.f32 %v385, %v390
        %v392 = vadd.f32 %v382, %v391
        %393 = vset.pattern.permute.xlu0 4
        %394 = vperm.xlu0 %393, %v351
        %v395 = vpop.permute.xlu0 %394
        %v397 = vlaneseq
        %v398 = vshrl.u32 %v397, 7
        %v399 = vsub.s32 4, %v398
        %v400 = vrot.slane %v348, %v399
        %v401 = vmul.f32 %v395, %v400
        %v402 = vadd.f32 %v392, %v401
        %403 = vset.pattern.permute.xlu0 5
        %404 = vperm.xlu0 %403, %v351
        %v405 = vpop.permute.xlu0 %404
        %v407 = vlaneseq
        %v408 = vshrl.u32 %v407, 7
        %v409 = vsub.s32 5, %v408
        %v410 = vrot.slane %v348, %v409
        %v411 = vmul.f32 %v405, %v410
        %v412 = vadd.f32 %v402, %v411
        %413 = vset.pattern.permute.xlu0 6
        %414 = vperm.xlu0 %413, %v351
        %v415 = vpop.permute.xlu0 %414
        %v417 = vlaneseq
        %v418 = vshrl.u32 %v417, 7
        %v419 = vsub.s32 6, %v418
        %v420 = vrot.slane %v348, %v419
        %v421 = vmul.f32 %v415, %v420
        %v422 = vadd.f32 %v412, %v421
        %423 = vset.pattern.permute.xlu0 7
        %424 = vperm.xlu0 %423, %v351
        %v425 = vpop.permute.xlu0 %424
        %v427 = vlaneseq
        %v428 = vshrl.u32 %v427, 7
        %v429 = vsub.s32 7, %v428
        %v430 = vrot.slane %v348, %v429
        %v431 = vmul.f32 %v425, %v430
        %v432 = vadd.f32 %v422, %v431
        %v433 = vld [vmem:[%s3] sm:$0x1]
        %v435 = vlaneseq
        %v436 = vshrl.u32 %v435, 7
        %v437 = vsub.s32 0, %v436
        %v438 = vrot.slane %v433, %v437
        %v440 = vadd.f32 %v432, %v438
        %441 = vst [vmem:[%s263] sm:$0xff] %v440
        %s442 = sand.u32 %s126, 1
        %s443 = scalar_lea.sflag [#allocation4], %s442
        %s444 = sand.u32 %s126, 1
        %s445 = smul.addr %s444, 8
        %s446 = scalar_lea.vmem [#allocation8], %s445
        // Predicated region
        $region49: #{tpu_custom_call.1} parent=35 // pred_check
          %p447 = pneg %p136
        $region50: #{tpu_custom_call.1} parent=35 // pred_check_branch
          %449 = sbr.rel (%p447) target = $region52
        $region51: #{tpu_custom_call.1} parent=35 // pred_region
          %s451 = ssub.s32 128, 128
          %452 = vsyncadd %s443, %s451
          %s453 = smul.addr %s24, 128
          %s454 = scalar_lea.hbm %s4, %s453
          %s456 = sshll.u32 %s446, 4
          %s457 = int_to_ptr.vmem [resolvable:$true] %s456
          %459 = dma.vmem_to_hbm [thread:$0]  %s457, 128, %s454, %s443
        $region52: #{tpu_custom_call.1} parent=35 // pred_fallthru
          _
      $region36: #{tpu_custom_call.1} parent=5 // pred_fallthru
        _
      %p460 = scmp.le.s32.totalorder 2, %s19
      // Predicated region
      $region53: #{tpu_custom_call.1} parent=5 // pred_check
        %p461 = pneg %p460
      $region54: #{tpu_custom_call.1} parent=5 // pred_check_branch
        %463 = sbr.rel (%p461) target = $region56
      $region55: #{tpu_custom_call.1} parent=5 // pred_region
        %s464 = ssub.s32 %s19, 2
        // Predicated region
        $region57: #{tpu_custom_call.1} parent=55 // pred_check
          %p465 = pneg %p142
        $region58: #{tpu_custom_call.1} parent=55 // pred_check_branch
          %467 = sbr.rel (%p465) target = $region60
        $region59: #{tpu_custom_call.1} parent=55 // pred_region
          %s468 = sand.u32 %s127, 1
          %s469 = scalar_lea.sflag [#allocation4], %s468
          %s470 = sand.u32 %s127, 1
          %s471 = smul.addr %s470, 8
          %s472 = scalar_lea.vmem [#allocation8], %s471
          %473 = dma.done %s469, 128
        $region60: #{tpu_custom_call.1} parent=55 // pred_fallthru
          _
      $region56: #{tpu_custom_call.1} parent=5 // pred_fallthru
        _
    $region6: #{tpu_custom_call.1} parent=1 // loop_footer
      %s23 = sadd.s32 1, %s19
    $region7: #{tpu_custom_call.1} parent=1 // loop_footer_branch
      %18 = sbr.rel target = $region3
    $region8: #{tpu_custom_call.1} parent=1 // loop_exit
      _
    %474 = vsyncpa [#allocation3], 1
    %s475 = scalar_lea.sflag [#allocation3], 1
    %476 = vsyncpa %s475, 1
    %477 = vsyncpa [#allocation6], 1
    %s478 = scalar_lea.sflag [#allocation6], 1
    %479 = vsyncpa %s478, 1
    %480 = vsyncpa [#allocation4], 1
    %s481 = scalar_lea.sflag [#allocation4], 1
    %482 = vsyncpa %s481, 1

</llo_original>
